<compile_context>
chip_gen: v6e
topology: v6e:2x2x1
jax: 0.10.0
libtpu: 0.0.40
codegen_flags: <defaults>
</compile_context>

<pallas_src>
import functools

import jax
import jax.numpy as jnp
from jax.experimental import pallas as pl
from jax.experimental.pallas import tpu as pltpu

EPS = 1e-5


# ---------------------------------------------------------------------------
# Kernel
# ---------------------------------------------------------------------------
def _mixer_kernel(x_ref, gamma_ref, beta_ref, wp_ref, bp_ref, w1_ref, b1_ref,
                  w2_ref, b2_ref, o_ref, *, groups, batch):
    """One grid step: `groups` T-tile groups x `batch` batch rows per block."""
    x_in = x_ref[...]                                  # (g*B, tT*Cin) compute dt
    xf = x_in.astype(jnp.float32)                      # BN math in f32

    # --- TimeBatchNorm2d: biased batch stats over the B rows of each group.
    if groups == 1:
        mean = jnp.mean(xf, axis=0, keepdims=True)
        xc = xf - mean                                 # reused for var and norm
        var = jnp.mean(xc * xc, axis=0, keepdims=True)
    else:
        # Several T-tile groups are folded into the row (M) dimension.  Build
        # the block-diagonal averaging matrix in-registers (iota + where) and
        # get the per-group mean/var via two tiny f32 matmuls -- avoids any
        # in-kernel sublane regrouping / reshape.
        rows = x_in.shape[0]
        rg = jax.lax.broadcasted_iota(jnp.int32, (rows, rows), 0) // batch
        cg = jax.lax.broadcasted_iota(jnp.int32, (rows, rows), 1) // batch
        mavg = jnp.where(rg == cg, jnp.float32(1.0 / batch), jnp.float32(0.0))
        mean = jnp.dot(mavg, xf, preferred_element_type=jnp.float32)
        xc = xf - mean
        var = jnp.dot(mavg, xc * xc, preferred_element_type=jnp.float32)

    xn = xc * jax.lax.rsqrt(var + EPS) * gamma_ref[...] + beta_ref[...]

    # --- three zero-free matmuls: projection, fc1 (+ReLU), fc2; MXU fed in the
    #     compute dtype (bf16 by default), accumulation in f32.
    cdt = x_in.dtype
    x_proj = jnp.dot(x_in, wp_ref[...],
                     preferred_element_type=jnp.float32) + bp_ref[...]
    h = jnp.maximum(
        jnp.dot(xn.astype(cdt), w1_ref[...],
                preferred_element_type=jnp.float32) + b1_ref[...], 0.0)
    y = jnp.dot(h.astype(cdt), w2_ref[...],
                preferred_element_type=jnp.float32) + b2_ref[...]

    # residual add + lane-dense store (block lane width = tile_t*Cout).
    o_ref[...] = (x_proj + y).astype(o_ref.dtype)


# ---------------------------------------------------------------------------
# Planning helpers
# ---------------------------------------------------------------------------
def _vmem_capacity_bytes():
    try:
        cap = getattr(pltpu.get_tpu_info(), "vmem_capacity_bytes", 0)
        if cap:
            return int(cap)
    except Exception:
        pass
    return 64 * 2 ** 20            # conservative default (v7x per-TensorCore VMEM)


def _plan(B, T, Cin, Cout, ff, itemsize, vmem_cap):
    """Pick (tile_t, groups_per_block, vmem_limit_bytes).

    tile_t bounds the kron block-diagonal expansion (MXU waste ~ tile_t,
    weight VMEM ~ tile_t^2) while keeping the output sub-tile 128-lane
    aligned; for Cout >= 128 this gives tile_t == 1 (plain per-timestep dense
    weights).  `groups_per_block` T-tile groups are folded into the matmul M
    dimension of each grid step.
    """
    divisors_T = [d for d in range(1, T + 1) if T % d == 0]
    tile_t = next((d for d in divisors_T if (d * Cout) % 128 == 0), None)
    if tile_t is None:                                   # T*Cout < 128
        tile_t = next((d for d in divisors_T if d * Cout >= 128), T)
    nt = T // tile_t
    X, Yf, Yp = tile_t * Cin, tile_t * ff, tile_t * Cout

    # Resident weights; count x2 since the single-buffer request may fall back
    # to Pallas' default double buffering.
    w_bytes = itemsize * (X * Yp + X * Yf + Yf * Yp) + 4 * (2 * Yp + Yf)

    def block_bytes(g):                                  # per-grid-step VMEM
        rows = g * B
        streamed = 2 * rows * (itemsize * (X + Yp) + 4 * 2 * X)  # double-buffered
        live = 4 * rows * (4 * X + Yf + 2 * Yp)                  # f32 temporaries
        return streamed + live

    soft_limit = min(int(vmem_cap * 0.6), 96 * 2 ** 20)  # ~38 MiB on v7x, ~77 MiB v5e/v6e
    budget = soft_limit - 2 * w_bytes - (2 << 20)         # headroom for Mosaic scratch

    legal = [g for g in range(1, nt + 1)
             if nt % g == 0 and (g == nt or (g * B) % 8 == 0)]   # (8,128) rule
    fits = [g for g in legal if block_bytes(g) <= budget]
    if fits:
        def score(g):
            steps = nt // g
            return (steps >= 2 or nt == 1,    # keep both v7x TensorCores busy
                    min(g * B, 512),          # fill MXU rows / vreg sublanes
                    -g)
        g = max(fits, key=score)
        vmem_limit = soft_limit
    else:
        # TODO(synk): if even the smallest legal block does not fit (very large
        # T*C), the weights themselves need a K/N grid axis or emit_pipeline
        # streaming from HBM; for now request the actual need.
        g = min(legal)
        vmem_limit = 2 * w_bytes + block_bytes(g) + (2 << 20)
    need = 2 * w_bytes + block_bytes(g) + (2 << 20)
    vmem_limit = int(min(max(vmem_limit, 16 * 2 ** 20),
                         max(vmem_cap - (8 << 20), need)))
    return tile_t, g, vmem_limit


# ---------------------------------------------------------------------------
# Single-buffered weight probe (pl.Buffered(1) support varies across builds)
# ---------------------------------------------------------------------------
_SINGLE_BUFFER_OK = None


def _probe_copy(x_ref, o_ref):
    o_ref[...] = x_ref[...]


def _single_buffer_weights_supported():
    """Probe pipeline_mode=pl.Buffered(1) once; fall back to the default
    double buffering for grid-invariant weights if this build rejects it."""
    global _SINGLE_BUFFER_OK
    if _SINGLE_BUFFER_OK is None:
        try:
            fn = pl.pallas_call(
                _probe_copy,
                out_shape=jax.ShapeDtypeStruct((8, 128), jnp.float32),
                grid=(2,),
                in_specs=[pl.BlockSpec((8, 128), lambda i: (0, 0),
                                       pipeline_mode=pl.Buffered(1))],
                out_specs=pl.BlockSpec((8, 128), lambda i: (0, 0)))
            jax.block_until_ready(fn(jnp.ones((8, 128), jnp.float32)))
            _SINGLE_BUFFER_OK = True
        except Exception:
            _SINGLE_BUFFER_OK = False
    return _SINGLE_BUFFER_OK


# ---------------------------------------------------------------------------
# Parameter preparation (one-time, at parameter-load time)
# ---------------------------------------------------------------------------
def prepare_params(params, *, batch, seq_len, compute_dtype=jnp.bfloat16):
    ff, Cin = params["w1"].shape
    Cout, _ = params["w2"].shape
    B, T = batch, seq_len
    cdt = jnp.dtype(compute_dtype)
    tile_t, g, vmem_limit = _plan(B, T, Cin, Cout, ff, cdt.itemsize,
                                  _vmem_capacity_bytes())
    nt = T // tile_t
    X, Yf, Yp = tile_t * Cin, tile_t * ff, tile_t * Cout

    # Per-timestep Linears -> bounded block-diagonal weights (kept separate:
    # projection / fc1 / fc2 each get a zero-free matrix).  Biases stay f32
    # (added onto f32 accumulators).
    eye = jnp.eye(tile_t, dtype=jnp.float32)
    wp_big = jnp.kron(eye, params["wp"].T.astype(jnp.float32)).astype(cdt)
    w1_big = jnp.kron(eye, params["w1"].T.astype(jnp.float32)).astype(cdt)
    w2_big = jnp.kron(eye, params["w2"].T.astype(jnp.float32)).astype(cdt)
    bp_t = jnp.tile(params["bp"].astype(jnp.float32), tile_t).reshape(1, Yp)
    b1_t = jnp.tile(params["b1"].astype(jnp.float32), tile_t).reshape(1, Yf)
    b2_t = jnp.tile(params["b2"].astype(jnp.float32), tile_t).reshape(1, Yp)

    # Affine BN params expanded to one f32 row per (T-tile, batch) kernel row.
    def rows(p):
        return jnp.broadcast_to(p.astype(jnp.float32).reshape(nt, 1, X),
                                (nt, B, X)).reshape(nt * B, X)

    return dict(wp=wp_big, bp=bp_t, w1=w1_big, b1=b1_t, w2=w2_big, b2=b2_t,
                gamma_rows=rows(params["gamma"]), beta_rows=rows(params["beta"]),
                dims=(Cin, Cout, ff), batch=B, seq_len=T, tile_t=tile_t,
                groups_per_block=g, compute_dtype=cdt, vmem_limit=vmem_limit)


# ---------------------------------------------------------------------------
# Forward wrapper
# ---------------------------------------------------------------------------
def market_info_mixer(x, prep):
    """x: (B, T, Cin); prep: output of prepare_params.  Returns (B, T, Cout)."""
    B, T, Cin = x.shape
    Cin_p, Cout, ff_dim = prep["dims"]
    assert (B, T, Cin) == (prep["batch"], prep["seq_len"], Cin_p)
    tile_t, g = prep["tile_t"], prep["groups_per_block"]
    nt = T // tile_t
    n_steps = nt // g
    X, Yf, Yp = tile_t * Cin, tile_t * ff_dim, tile_t * Cout
    R, rows_per_step = nt * B, g * B
    cdt = prep["compute_dtype"]
    itemsize = cdt.itemsize

    # (B, T, Cin) -> (nt*B, tile_t*Cin), T-tile-major rows, so every grid step
    # owns whole BN groups and the MXU M dim is g*B (leading-axis-only reshape
    # / transpose, done wrapper-side).
    x2 = x.reshape(B, nt, X).transpose(1, 0, 2).reshape(R, X).astype(cdt)

    # Executed (not merely "useful") FLOPs for the scheduler hint.
    flops = 2 * R * (X * Yp + X * Yf + Yf * Yp)
    if g > 1:
        flops += 2 * 2 * R * rows_per_step * X           # grouped-BN matmuls
    bytes_accessed = int(itemsize * (R * X + R * Yp + prep["wp"].size
                                     + prep["w1"].size + prep["w2"].size)
                         + 4 * (2 * R * X + Yf + 2 * Yp))

    kernel = functools.partial(_mixer_kernel, groups=g, batch=B)

    def build(single_buffer_weights):
        def wspec(shape):
            if single_buffer_weights:
                return pl.BlockSpec(shape, lambda i: (0, 0),
                                    pipeline_mode=pl.Buffered(1))
            return pl.BlockSpec(shape, lambda i: (0, 0))
        return pl.pallas_call(
            kernel,
            out_shape=jax.ShapeDtypeStruct((R, Yp), cdt),
            grid=(n_steps,),
            in_specs=[
                pl.BlockSpec((rows_per_step, X), lambda i: (i, 0)),   # x rows
                pl.BlockSpec((rows_per_step, X), lambda i: (i, 0)),   # gamma rows
                pl.BlockSpec((rows_per_step, X), lambda i: (i, 0)),   # beta rows
                wspec((X, Yp)), wspec((1, Yp)),                       # projection
                wspec((X, Yf)), wspec((1, Yf)),                       # fc1
                wspec((Yf, Yp)), wspec((1, Yp)),                      # fc2
            ],
            out_specs=pl.BlockSpec((rows_per_step, Yp), lambda i: (i, 0)),
            compiler_params=pltpu.CompilerParams(
                dimension_semantics=("parallel",),
                vmem_limit_bytes=prep["vmem_limit"]),
            cost_estimate=pl.CostEstimate(flops=flops, transcendentals=R * X,
                                          bytes_accessed=bytes_accessed),
        )

    args = (x2, prep["gamma_rows"], prep["beta_rows"], prep["wp"], prep["bp"],
            prep["w1"], prep["b1"], prep["w2"], prep["b2"])
    out2 = build(_single_buffer_weights_supported())(*args)

    # (nt*B, tile_t*Cout) -> (B, T, Cout); leading-axis only, cheap.
    return out2.reshape(nt, B, tile_t, Cout).transpose(1, 0, 2, 3).reshape(B, T, Cout)


# ---------------------------------------------------------------------------
# Pure-JAX reference & parameter init (for the self-check)
# ---------------------------------------------------------------------------
def _reference(x, params):
    B, T, Cin = x.shape
    gamma = params["gamma"].reshape(1, T, Cin)
    beta = params["beta"].reshape(1, T, Cin)
    x_proj = x @ params["wp"].T + params["bp"]
    mean = jnp.mean(x, axis=0, keepdims=True)
    var = jnp.mean(jnp.square(x - mean), axis=0, keepdims=True)
    xn = (x - mean) / jnp.sqrt(var + EPS) * gamma + beta
    h = jnp.maximum(xn @ params["w1"].T + params["b1"], 0.0)
    y = h @ params["w2"].T + params["b2"]
    return x_proj + y


def _init_params(key, T, Cin, Cout, ff):
    ks = jax.random.split(key, 6)

    def lin(k, fan_in, shape):
        bound = 1.0 / jnp.sqrt(fan_in)
        return jax.random.uniform(k, shape, jnp.float32, -bound, bound)

    return {
        "gamma": jnp.ones((T * Cin,), jnp.float32),
        "beta": jnp.zeros((T * Cin,), jnp.float32),
        "w1": lin(ks[0], Cin, (ff, Cin)), "b1": lin(ks[1], Cin, (ff,)),
        "w2": lin(ks[2], ff, (Cout, ff)), "b2": lin(ks[3], ff, (Cout,)),
        "wp": lin(ks[4], Cin, (Cout, Cin)), "bp": lin(ks[5], Cin, (Cout,)),
    }


if __name__ == "__main__":
    def run_case(name, B, T, Cin, Cout, ff, key):
        kx, kp = jax.random.split(key)
        x = jax.random.normal(kx, (B, T, Cin), jnp.float32)
        params = _init_params(kp, T, Cin, Cout, ff)

        for cdt, tol in ((jnp.float32, 1e-3), (jnp.bfloat16, 3e-2)):
            prep = prepare_params(params, batch=B, seq_len=T, compute_dtype=cdt)
            out = jax.block_until_ready(market_info_mixer(x, prep))
            assert out.shape == (B, T, Cout), (name, out.shape)
            if cdt == jnp.bfloat16:
                # Compare against the reference evaluated on bf16-rounded
                # inputs/weights (the kernel streams x and the Linear weights
                # in bf16 with f32 BN math / accumulation).
                q = lambda a: a.astype(jnp.bfloat16).astype(jnp.float32)
                ref = _reference(q(x), {k: q(v) for k, v in params.items()})
            else:
                ref = _reference(x, params)
            got = out.astype(jnp.float32)
            err = float(jnp.max(jnp.abs(got - ref)))
            assert jnp.allclose(got, ref, atol=tol, rtol=tol), (
                f"{name}/{jnp.dtype(cdt).name}: max abs diff {err}")

    k1, k2 = jax.random.split(jax.random.PRNGKey(0))
    # Module demo shapes (projection branch active: Cin != Cout); single grid
    # step with a lane-dense 128-wide output slab.
    run_case("small", B=2, T=8, Cin=4, Cout=16, ff=32, key=k1)
    # Exercises the grouped-BN / multi-grid-step path: 2 "parallel" steps so
    # both v7x TensorCores get work, MXU M = 8 rows per step.
    run_case("grouped", B=4, T=16, Cin=8, Cout=32, ff=64, key=k2)
    print("KERNEL_OK")
</pallas_src>

<mosaic_0001>
module attributes {stable_mosaic.version = 11 : i64} {
  func.func @_probe_copy(%arg0: i32, %arg1: memref<8x128xf32, #tpu.memory_space<vmem>>, %arg2: memref<8x128xf32, #tpu.memory_space<vmem>>) attributes {dimension_semantics = [#tpu.dimension_semantics<arbitrary>], iteration_bounds = array<i64: 2>, scalar_prefetch = 0 : i64, scratch_operands = 0 : i64, tpu.core_type = #tpu.core_type<tc>, window_params = [{pipeline_mode = #tpu.pipeline_mode<synchronous>, transform_indices = @transform_0, window_bounds = array<i64: 8, 128>}, {pipeline_mode = #tpu.pipeline_mode<synchronous>, transform_indices = @transform_1, window_bounds = array<i64: 8, 128>}]} {
    %c0 = arith.constant 0 : index
    %c0_0 = arith.constant 0 : index
    %0 = vector.load %arg1[%c0, %c0_0] : memref<8x128xf32, #tpu.memory_space<vmem>>, vector<8x128xf32>
    %c0_1 = arith.constant 0 : index
    %c0_2 = arith.constant 0 : index
    %1 = vector.load %arg2[%c0_1, %c0_2] : memref<8x128xf32, #tpu.memory_space<vmem>>, vector<8x128xf32>
    tpu.vector_store %arg2[%c0_1, %c0_2], %0 {strides = array<i32>} : memref<8x128xf32, #tpu.memory_space<vmem>>, vector<8x128xf32>,
    return
  }
  func.func @transform_0(%arg0: i32) -> (i32, i32) {
    %c0_i32 = arith.constant 0 : i32
    %c0_i32_0 = arith.constant 0 : i32
    %c0_i32_1 = arith.constant 0 : i32
    return %c0_i32, %c0_i32_0 : i32, i32
  }
  func.func @transform_1(%arg0: i32) -> (i32, i32) {
    %c0_i32 = arith.constant 0 : i32
    %c0_i32_0 = arith.constant 0 : i32
    %c0_i32_1 = arith.constant 0 : i32
    return %c0_i32, %c0_i32_0 : i32, i32
  }
}

module attributes {stable_mosaic.version = 11 : i64} {
  func.func @_mixer_kernel(%arg0: i32, %arg1: memref<2x32xf32, #tpu.memory_space<vmem>>, %arg2: memref<2x32xf32, #tpu.memory_space<vmem>>, %arg3: memref<2x32xf32, #tpu.memory_space<vmem>>, %arg4: memref<32x128xf32, #tpu.memory_space<vmem>>, %arg5: memref<1x128xf32, #tpu.memory_space<vmem>>, %arg6: memref<32x256xf32, #tpu.memory_space<vmem>>, %arg7: memref<1x256xf32, #tpu.memory_space<vmem>>, %arg8: memref<256x128xf32, #tpu.memory_space<vmem>>, %arg9: memref<1x128xf32, #tpu.memory_space<vmem>>, %arg10: memref<2x128xf32, #tpu.memory_space<vmem>>) attributes {dimension_semantics = [#tpu.dimension_semantics<parallel>], iteration_bounds = array<i64: 1>, scalar_prefetch = 0 : i64, scratch_operands = 0 : i64, tpu.core_type = #tpu.core_type<tc>, window_params = [{transform_indices = @transform_0, window_bounds = array<i64: 2, 32>}, {transform_indices = @transform_1, window_bounds = array<i64: 2, 32>}, {transform_indices = @transform_2, window_bounds = array<i64: 2, 32>}, {pipeline_mode = #tpu.pipeline_mode<synchronous>, transform_indices = @transform_3, window_bounds = array<i64: 32, 128>}, {pipeline_mode = #tpu.pipeline_mode<synchronous>, transform_indices = @transform_4, window_bounds = array<i64: 1, 128>}, {pipeline_mode = #tpu.pipeline_mode<synchronous>, transform_indices = @transform_5, window_bounds = array<i64: 32, 256>}, {pipeline_mode = #tpu.pipeline_mode<synchronous>, transform_indices = @transform_6, window_bounds = array<i64: 1, 256>}, {pipeline_mode = #tpu.pipeline_mode<synchronous>, transform_indices = @transform_7, window_bounds = array<i64: 256, 128>}, {pipeline_mode = #tpu.pipeline_mode<synchronous>, transform_indices = @transform_8, window_bounds = array<i64: 1, 128>}, {transform_indices = @transform_9, window_bounds = array<i64: 2, 128>}]} {
    %c0 = arith.constant 0 : index
    %c0_0 = arith.constant 0 : index
    %0 = vector.load %arg1[%c0, %c0_0] : memref<2x32xf32, #tpu.memory_space<vmem>>, vector<2x32xf32>
    %cst = arith.constant dense<0.000000e+00> : vector<32xf32>
    %1 = vector.multi_reduction <add>, %0, %cst [0] : vector<2x32xf32> to vector<32xf32>
    %2 = vector.shape_cast %1 : vector<32xf32> to vector<1x32xf32>
    %cst_1 = arith.constant 2.000000e+00 : f32
    %3 = vector.broadcast %cst_1 : f32 to vector<1x32xf32>
    %4 = arith.divf %2, %3 : vector<1x32xf32>
    %5 = vector.broadcast %4 : vector<1x32xf32> to vector<2x32xf32>
    %6 = arith.subf %0, %5 : vector<2x32xf32>
    %7 = arith.mulf %6, %6 : vector<2x32xf32>
    %cst_2 = arith.constant dense<0.000000e+00> : vector<32xf32>
    %8 = vector.multi_reduction <add>, %7, %cst_2 [0] : vector<2x32xf32> to vector<32xf32>
    %9 = vector.shape_cast %8 : vector<32xf32> to vector<1x32xf32>
    %cst_3 = arith.constant 2.000000e+00 : f32
    %10 = vector.broadcast %cst_3 : f32 to vector<1x32xf32>
    %11 = arith.divf %9, %10 : vector<1x32xf32>
    %cst_4 = arith.constant 9.99999974E-6 : f32
    %12 = vector.broadcast %cst_4 : f32 to vector<1x32xf32>
    %13 = arith.addf %11, %12 : vector<1x32xf32>
    %14 = math.rsqrt %13 : vector<1x32xf32>
    %15 = vector.broadcast %14 : vector<1x32xf32> to vector<2x32xf32>
    %16 = arith.mulf %6, %15 : vector<2x32xf32>
    %c0_5 = arith.constant 0 : index
    %c0_6 = arith.constant 0 : index
    %17 = vector.load %arg2[%c0_5, %c0_6] : memref<2x32xf32, #tpu.memory_space<vmem>>, vector<2x32xf32>
    %18 = arith.mulf %16, %17 : vector<2x32xf32>
    %c0_7 = arith.constant 0 : index
    %c0_8 = arith.constant 0 : index
    %19 = vector.load %arg3[%c0_7, %c0_8] : memref<2x32xf32, #tpu.memory_space<vmem>>, vector<2x32xf32>
    %20 = arith.addf %18, %19 : vector<2x32xf32>
    %c0_9 = arith.constant 0 : index
    %c0_10 = arith.constant 0 : index
    %21 = vector.load %arg4[%c0_9, %c0_10] : memref<32x128xf32, #tpu.memory_space<vmem>>, vector<32x128xf32>
    %cst_11 = arith.constant dense<0.000000e+00> : vector<2x128xf32>
    %22 = tpu.matmul %0, %21, %cst_11 {dimension_numbers = #tpu.dot_dimension_numbers<[1], [0], [0], [1], [0, 0, 1, 1], [], []>} : vector<2x32xf32>, vector<32x128xf32>, vector<2x128xf32> -> vector<2x128xf32>
    %c0_12 = arith.constant 0 : index
    %c0_13 = arith.constant 0 : index
    %23 = vector.load %arg5[%c0_12, %c0_13] : memref<1x128xf32, #tpu.memory_space<vmem>>, vector<1x128xf32>
    %24 = vector.broadcast %23 : vector<1x128xf32> to vector<2x128xf32>
    %25 = arith.addf %22, %24 : vector<2x128xf32>
    %c0_14 = arith.constant 0 : index
    %c0_15 = arith.constant 0 : index
    %26 = vector.load %arg6[%c0_14, %c0_15] : memref<32x256xf32, #tpu.memory_space<vmem>>, vector<32x256xf32>
    %cst_16 = arith.constant dense<0.000000e+00> : vector<2x256xf32>
    %27 = tpu.matmul %20, %26, %cst_16 {dimension_numbers = #tpu.dot_dimension_numbers<[1], [0], [0], [1], [0, 0, 1, 1], [], []>} : vector<2x32xf32>, vector<32x256xf32>, vector<2x256xf32> -> vector<2x256xf32>
    %c0_17 = arith.constant 0 : index
    %c0_18 = arith.constant 0 : index
    %28 = vector.load %arg7[%c0_17, %c0_18] : memref<1x256xf32, #tpu.memory_space<vmem>>, vector<1x256xf32>
    %29 = vector.broadcast %28 : vector<1x256xf32> to vector<2x256xf32>
    %30 = arith.addf %27, %29 : vector<2x256xf32>
    %cst_19 = arith.constant 0.000000e+00 : f32
    %31 = vector.broadcast %cst_19 : f32 to vector<2x256xf32>
    %32 = arith.maximumf %30, %31 : vector<2x256xf32>
    %c0_20 = arith.constant 0 : index
    %c0_21 = arith.constant 0 : index
    %33 = vector.load %arg8[%c0_20, %c0_21] : memref<256x128xf32, #tpu.memory_space<vmem>>, vector<256x128xf32>
    %cst_22 = arith.constant dense<0.000000e+00> : vector<2x128xf32>
    %34 = tpu.matmul %32, %33, %cst_22 {dimension_numbers = #tpu.dot_dimension_numbers<[1], [0], [0], [1], [0, 0, 1, 1], [], []>} : vector<2x256xf32>, vector<256x128xf32>, vector<2x128xf32> -> vector<2x128xf32>
    %c0_23 = arith.constant 0 : index
    %c0_24 = arith.constant 0 : index
    %35 = vector.load %arg9[%c0_23, %c0_24] : memref<1x128xf32, #tpu.memory_space<vmem>>, vector<1x128xf32>
    %36 = vector.broadcast %35 : vector<1x128xf32> to vector<2x128xf32>
    %37 = arith.addf %34, %36 : vector<2x128xf32>
    %38 = arith.addf %25, %37 : vector<2x128xf32>
    %c0_25 = arith.constant 0 : index
    %c0_26 = arith.constant 0 : index
    %39 = vector.load %arg10[%c0_25, %c0_26] : memref<2x128xf32, #tpu.memory_space<vmem>>, vector<2x128xf32>
    tpu.vector_store %arg10[%c0_25, %c0_26], %38 {strides = array<i32>} : memref<2x128xf32, #tpu.memory_space<vmem>>, vector<2x128xf32>,
    return
  }
  func.func @transform_0(%arg0: i32) -> (i32, i32) {
    %c0_i32 = arith.constant 0 : i32
    %c0_i32_0 = arith.constant 0 : i32
    return %arg0, %c0_i32 : i32, i32
  }
  func.func @transform_1(%arg0: i32) -> (i32, i32) {
    %c0_i32 = arith.constant 0 : i32
    %c0_i32_0 = arith.constant 0 : i32
    return %arg0, %c0_i32 : i32, i32
  }
  func.func @transform_2(%arg0: i32) -> (i32, i32) {
    %c0_i32 = arith.constant 0 : i32
    %c0_i32_0 = arith.constant 0 : i32
    return %arg0, %c0_i32 : i32, i32
  }
  func.func @transform_3(%arg0: i32) -> (i32, i32) {
    %c0_i32 = arith.constant 0 : i32
    %c0_i32_0 = arith.constant 0 : i32
    %c0_i32_1 = arith.constant 0 : i32
    return %c0_i32, %c0_i32_0 : i32, i32
  }
  func.func @transform_4(%arg0: i32) -> (i32, i32) {
    %c0_i32 = arith.constant 0 : i32
    %c0_i32_0 = arith.constant 0 : i32
    %c0_i32_1 = arith.constant 0 : i32
    return %c0_i32, %c0_i32_0 : i32, i32
  }
  func.func @transform_5(%arg0: i32) -> (i32, i32) {
    %c0_i32 = arith.constant 0 : i32
    %c0_i32_0 = arith.constant 0 : i32
    %c0_i32_1 = arith.constant 0 : i32
    return %c0_i32, %c0_i32_0 : i32, i32
  }
  func.func @transform_6(%arg0: i32) -> (i32, i32) {
    %c0_i32 = arith.constant 0 : i32
    %c0_i32_0 = arith.constant 0 : i32
    %c0_i32_1 = arith.constant 0 : i32
    return %c0_i32, %c0_i32_0 : i32, i32
  }
  func.func @transform_7(%arg0: i32) -> (i32, i32) {
    %c0_i32 = arith.constant 0 : i32
    %c0_i32_0 = arith.constant 0 : i32
    %c0_i32_1 = arith.constant 0 : i32
    return %c0_i32, %c0_i32_0 : i32, i32
  }
  func.func @transform_8(%arg0: i32) -> (i32, i32) {
    %c0_i32 = arith.constant 0 : i32
    %c0_i32_0 = arith.constant 0 : i32
    %c0_i32_1 = arith.constant 0 : i32
    return %c0_i32, %c0_i32_0 : i32, i32
  }
  func.func @transform_9(%arg0: i32) -> (i32, i32) {
    %c0_i32 = arith.constant 0 : i32
    %c0_i32_0 = arith.constant 0 : i32
    return %arg0, %c0_i32 : i32, i32
  }
}

</mosaic_0001>

<llo_original>
// kernel: tpu_custom_call.1
$region0: #{tpu_custom_call.1}
  #allocation0 [shape = 'u32[]', space=smem, size = 0x4, offset = 0x4, fixed_abs, tag = 'smem constant byte address 0x4 - core index']
  #allocation1 [shape = 'u32[144,128]{1,0:T(1,128)}', space=vmem, size = 0x12000, scoped, tag = 'internal scratch']
  %s0 = inlined_call_operand.hbm [shape: f32[8,128], index: 0, kind: input, shape index: {}]
  %s1 = inlined_call_operand.hbm [shape: f32[8,128], index: 1, kind: output, shape index: {}]
  %s2 = sld [smem:[#allocation0]]
  $region41: #{tpu_custom_call.1} parent=0
    _
  %s4 = ssub.s32 1, %s2
  %s5 = scalar_select 0, %s4, %s2
  $region1: #{tpu_custom_call.1} parent=0
    #allocation2 [shape = 'u8[4096]{0}', space=vmem, size = 0x1000, scoped, tag = 'input window, operand 0, single buffered']
    #allocation3 [shape = 's32[2]{0}', space=sflag, size = 0x8, scoped, tag = 'scoped memory for tpu_custom_call.1']
    #allocation4 [shape = 's32[2]{0}', space=sflag, size = 0x8, scoped, tag = 'scoped memory for tpu_custom_call.1']
    #allocation5 [shape = 'u8[4096]{0}', space=vmem, size = 0x1000, scoped, tag = 'output window, operand 0, single buffered']
    %6 = vsyncpa [#allocation3], 0
    %7 = vsyncpa [#allocation4], 0
    loop: start=0, step=1, limit=4
    $region2: #{tpu_custom_call.1} parent=1 // loop_pre_header
      _
    $region3: #{tpu_custom_call.1} parent=1 // loop_header
      %s9 = sphi 0, %s13
      %p10 = scmp.ge.s32.totalorder %s9, 4
      %s17 = sphi 0, %s17
      %s19 = sphi 0, %s17
      %s20 = sphi 0, %s19
      %s34 = sphi 0, %s20
      %s38 = sphi 0, %s38
      %s40 = sphi 0, %s38
      %s41 = sphi 0, %s40
      %s55 = sphi 0, %s41
    $region4: #{tpu_custom_call.1} parent=1 // loop_header_branch
      %12 = sbr.rel (%p10) target = $region8
    $region5: #{tpu_custom_call.1} parent=1 // loop_body
      %s14 = ssub.s32 %s9, 1
      %s15 = ssub.s32 %s9, 2
      %s16 = sadd.s32 %s9, 1
      %s18 = sadd.s32 %s17, 1
      %p21 = scmp.eq.s32.totalorder %s9, 1
      %p22 = scmp.ne.s32.totalorder %s17, %s19
      %p23 = scmp.eq.s32.totalorder %s9, 0
      %p24 = por %p22, %p23
      %p25 = scmp.ne.s32.totalorder %s17, %s19
      %p26 = scmp.eq.s32.totalorder %s14, 1
      %p27 = por %p25, %p26
      %p28 = scmp.ne.s32.totalorder %s19, %s20
      %p29 = scmp.eq.s32.totalorder %s14, 0
      %p30 = por %p28, %p29
      %p31 = scmp.ne.s32.totalorder %s19, %s20
      %p32 = scmp.eq.s32.totalorder %s15, 1
      %p33 = por %p31, %p32
      %p35 = scmp.ne.s32.totalorder %s20, %s34
      %p36 = scmp.eq.s32.totalorder %s15, 0
      %p37 = por %p35, %p36
      %s39 = sadd.s32 %s38, 1
      %p42 = scmp.eq.s32.totalorder %s9, 1
      %p43 = scmp.ne.s32.totalorder %s38, %s40
      %p44 = scmp.eq.s32.totalorder %s9, 0
      %p45 = por %p43, %p44
      %p46 = scmp.ne.s32.totalorder %s38, %s40
      %p47 = scmp.eq.s32.totalorder %s14, 1
      %p48 = por %p46, %p47
      %p49 = scmp.ne.s32.totalorder %s40, %s41
      %p50 = scmp.eq.s32.totalorder %s14, 0
      %p51 = por %p49, %p50
      %p52 = scmp.ne.s32.totalorder %s40, %s41
      %p53 = scmp.eq.s32.totalorder %s15, 1
      %p54 = por %p52, %p53
      %p56 = scmp.ne.s32.totalorder %s41, %s55
      %p57 = scmp.eq.s32.totalorder %s15, 0
      %p58 = por %p56, %p57
      %p59 = scmp.le.s32.totalorder 1, %s9
      %p60 = scmp.lt.s32.totalorder %s9, 3
      %p61 = pnand %p59, %p60
      %p62 = pneg %p61
      // Predicated region
      $region9: #{tpu_custom_call.1} parent=5 // pred_check
        _
      $region10: #{tpu_custom_call.1} parent=5 // pred_check_branch
        %64 = sbr.rel (%p61) target = $region12
      $region11: #{tpu_custom_call.1} parent=5 // pred_region
        %s65 = ssub.s32 %s9, 1
        // Predicated region
        $region13: #{tpu_custom_call.1} parent=11 // pred_check
          %p66 = pneg %p30
        $region14: #{tpu_custom_call.1} parent=11 // pred_check_branch
          %68 = sbr.rel (%p66) target = $region16
        $region15: #{tpu_custom_call.1} parent=11 // pred_region
          %s70 = ssub.s32 128, 128
          %71 = vsyncadd [#allocation3], %s70
          %s73 = sshll.u32 [#allocation2], 4
          %s74 = int_to_ptr.vmem [resolvable:$true] %s73
          %76 = dma.hbm_to_vmem [thread:$0]  %s0, 128, %s74, [#allocation3]
        $region16: #{tpu_custom_call.1} parent=11 // pred_fallthru
          _
      $region12: #{tpu_custom_call.1} parent=5 // pred_fallthru
        _
      %p77 = scmp.lt.s32.totalorder %s9, 2
      // Predicated region
      $region17: #{tpu_custom_call.1} parent=5 // pred_check
        %p78 = pneg %p77
      $region18: #{tpu_custom_call.1} parent=5 // pred_check_branch
        %80 = sbr.rel (%p78) target = $region20
      $region19: #{tpu_custom_call.1} parent=5 // pred_region
        _
      $region20: #{tpu_custom_call.1} parent=5 // pred_fallthru
        _
      %p81 = scmp.le.s32.totalorder 1, %s9
      %p82 = scmp.lt.s32.totalorder %s9, 3
      %p83 = pnand %p81, %p82
      %p84 = pneg %p83
      // Predicated region
      $region21: #{tpu_custom_call.1} parent=5 // pred_check
        _
      $region22: #{tpu_custom_call.1} parent=5 // pred_check_branch
        %86 = sbr.rel (%p83) target = $region24
      $region23: #{tpu_custom_call.1} parent=5 // pred_region
        %s87 = ssub.s32 %s9, 1
        // Predicated region
        $region25: #{tpu_custom_call.1} parent=23 // pred_check
          %p88 = pneg %p30
        $region26: #{tpu_custom_call.1} parent=23 // pred_check_branch
          %90 = sbr.rel (%p88) target = $region28
        $region27: #{tpu_custom_call.1} parent=23 // pred_region
          %91 = dma.done [#allocation3], 128
        $region28: #{tpu_custom_call.1} parent=23 // pred_fallthru
          _
        %p92 = pneg %p30
        %p93 = pneg %p27
        %p94 = pneg %p51
        %p95 = pneg %p48
        %v96 = vld [vmem:[#allocation2] sm:$0xff]
        %97 = vst [vmem:[#allocation5] sm:$0xff] %v96
        // Predicated region
        $region29: #{tpu_custom_call.1} parent=23 // pred_check
          %p98 = pneg %p48
        $region30: #{tpu_custom_call.1} parent=23 // pred_check_branch
          %100 = sbr.rel (%p98) target = $region32
        $region31: #{tpu_custom_call.1} parent=23 // pred_region
          %s102 = ssub.s32 128, 128
          %103 = vsyncadd [#allocation4], %s102
          %s105 = sshll.u32 [#allocation5], 4
          %s106 = int_to_ptr.vmem [resolvable:$true] %s105
          %108 = dma.vmem_to_hbm [thread:$0]  %s106, 128, %s1, [#allocation4]
        $region32: #{tpu_custom_call.1} parent=23 // pred_fallthru
          _
        // Predicated region
        $region33: #{tpu_custom_call.1} parent=23 // pred_check
          %p109 = pneg %p48
        $region34: #{tpu_custom_call.1} parent=23 // pred_check_branch
          %111 = sbr.rel (%p109) target = $region36
        $region35: #{tpu_custom_call.1} parent=23 // pred_region
          %112 = dma.done [#allocation4], 128
        $region36: #{tpu_custom_call.1} parent=23 // pred_fallthru
          _
      $region24: #{tpu_custom_call.1} parent=5 // pred_fallthru
        _
      %p113 = scmp.le.s32.totalorder 2, %s9
      // Predicated region
      $region37: #{tpu_custom_call.1} parent=5 // pred_check
        %p114 = pneg %p113
      $region38: #{tpu_custom_call.1} parent=5 // pred_check_branch
        %116 = sbr.rel (%p114) target = $region40
      $region39: #{tpu_custom_call.1} parent=5 // pred_region
        %s117 = ssub.s32 %s9, 2
      $region40: #{tpu_custom_call.1} parent=5 // pred_fallthru
        _
    $region6: #{tpu_custom_call.1} parent=1 // loop_footer
      %s13 = sadd.s32 1, %s9
    $region7: #{tpu_custom_call.1} parent=1 // loop_footer_branch
      %8 = sbr.rel target = $region3
    $region8: #{tpu_custom_call.1} parent=1 // loop_exit
      _
    %118 = vsyncpa [#allocation3], 1
    %s119 = scalar_lea.sflag [#allocation3], 1
    %120 = vsyncpa %s119, 1
    %121 = vsyncpa [#allocation4], 1
    %s122 = scalar_lea.sflag [#allocation4], 1
    %123 = vsyncpa %s122, 1

// kernel: tpu_custom_call.1
$region0: #{tpu_custom_call.1}
  #allocation0 [shape = 'u32[]', space=smem, size = 0x4, offset = 0x4, fixed_abs, tag = 'smem constant byte address 0x4 - core index']
  #allocation1 [shape = 'u32[144,128]{1,0:T(1,128)}', space=vmem, size = 0x12000, scoped, tag = 'internal scratch']
  %s0 = inlined_call_operand.hbm [shape: f32[2,32], index: 0, kind: input, shape index: {}]
  %s1 = inlined_call_operand.hbm [shape: f32[2,32], index: 1, kind: input, shape index: {}]
  %s2 = inlined_call_operand.vmem [shape: f32[2,32], index: 2, kind: input, shape index: {}]
  %s3 = inlined_call_operand.hbm [shape: f32[32,128], index: 3, kind: input, shape index: {}]
  %s4 = inlined_call_operand.vmem [shape: f32[1,128], index: 4, kind: input, shape index: {}]
  %s5 = inlined_call_operand.hbm [shape: f32[32,256], index: 5, kind: input, shape index: {}]
  %s6 = inlined_call_operand.vmem [shape: f32[1,256], index: 6, kind: input, shape index: {}]
  %s7 = inlined_call_operand.hbm [shape: f32[256,128], index: 7, kind: input, shape index: {}]
  %s8 = inlined_call_operand.vmem [shape: f32[1,128], index: 8, kind: input, shape index: {}]
  %s9 = inlined_call_operand.hbm [shape: f32[2,128], index: 9, kind: output, shape index: {}]
  %s10 = sld [smem:[#allocation0]]
  $region66: #{tpu_custom_call.1} parent=0
    _
  %s12 = ssub.s32 1, %s10
  %s13 = scalar_select 0, %s12, %s10
  $region1: #{tpu_custom_call.1} parent=0
    #allocation2 [shape = 'u8[1024]{0}', space=vmem, size = 0x400, scoped, tag = 'input window, operand 0, single buffered']
    #allocation3 [shape = 's32[1]{0}', space=sflag, size = 0x4, scoped, tag = 'scoped memory for tpu_custom_call.1']
    #allocation4 [shape = 's32[1]{0}', space=sflag, size = 0x4, scoped, tag = 'scoped memory for tpu_custom_call.1']
    #allocation5 [shape = 'u8[1024]{0}', space=vmem, size = 0x400, scoped, tag = 'input window, operand 1, single buffered']
    #allocation6 [shape = 's32[1]{0}', space=sflag, size = 0x4, scoped, tag = 'scoped memory for tpu_custom_call.1']
    #allocation7 [shape = 'u8[16384]{0}', space=vmem, size = 0x4000, scoped, tag = 'input window, operand 3, single buffered']
    #allocation8 [shape = 'u8[32768]{0}', space=vmem, size = 0x8000, scoped, tag = 'input window, operand 5, single buffered']
    #allocation9 [shape = 's32[1]{0}', space=sflag, size = 0x4, scoped, tag = 'scoped memory for tpu_custom_call.1']
    #allocation10 [shape = 'u8[131072]{0}', space=vmem, size = 0x20000, scoped, tag = 'input window, operand 7, single buffered']
    #allocation11 [shape = 'u8[1024]{0}', space=vmem, size = 0x400, scoped, tag = 'output window, operand 0, single buffered']
    %14 = vsyncpa [#allocation3], 0
    %15 = vsyncpa [#allocation6], 0
    %16 = vsyncpa [#allocation9], 0
    %17 = vsyncpa [#allocation4], 0
    // Predicated region
    $region2: #{tpu_custom_call.1} parent=1 // pred_check
      _
    $region3: #{tpu_custom_call.1} parent=1 // pred_check_branch
      %19 = sbr.rel (0) target = $region5
    $region4: #{tpu_custom_call.1} parent=1 // pred_region
      %s21 = ssub.s32 32, 32
      %22 = vsyncadd [#allocation3], %s21
      %s24 = sshll.u32 [#allocation2], 4
      %s25 = int_to_ptr.vmem [resolvable:$true] %s24
      %27 = dma.hbm_to_vmem [thread:$0]  %s0, 32, %s25, [#allocation3]
    $region5: #{tpu_custom_call.1} parent=1 // pred_fallthru
      _
    // Predicated region
    $region6: #{tpu_custom_call.1} parent=1 // pred_check
      _
    $region7: #{tpu_custom_call.1} parent=1 // pred_check_branch
      %29 = sbr.rel (0) target = $region9
    $region8: #{tpu_custom_call.1} parent=1 // pred_region
      %s31 = ssub.s32 32, 32
      %32 = vsyncadd [#allocation6], %s31
      %s34 = sshll.u32 [#allocation5], 4
      %s35 = int_to_ptr.vmem [resolvable:$true] %s34
      %37 = dma.hbm_to_vmem [thread:$0]  %s1, 32, %s35, [#allocation6]
    $region9: #{tpu_custom_call.1} parent=1 // pred_fallthru
      _
    // Predicated region
    $region10: #{tpu_custom_call.1} parent=1 // pred_check
      _
    $region11: #{tpu_custom_call.1} parent=1 // pred_check_branch
      %39 = sbr.rel (0) target = $region13
    $region12: #{tpu_custom_call.1} parent=1 // pred_region
      _
    $region13: #{tpu_custom_call.1} parent=1 // pred_fallthru
      _
    // Predicated region
    $region14: #{tpu_custom_call.1} parent=1 // pred_check
      _
    $region15: #{tpu_custom_call.1} parent=1 // pred_check_branch
      %41 = sbr.rel (0) target = $region17
    $region16: #{tpu_custom_call.1} parent=1 // pred_region
      %s43 = ssub.s32 512, 512
      %44 = vsyncadd [#allocation6], %s43
      %s45 = sshll.u32 [#allocation7], 4
      %s46 = int_to_ptr.vmem [resolvable:$true] %s45
      %51 = dma.hbm_to_vmem [thread:$0]  %s3, 512, %s46, [#allocation6], 128, 128, 8
    $region17: #{tpu_custom_call.1} parent=1 // pred_fallthru
      _
    // Predicated region
    $region18: #{tpu_custom_call.1} parent=1 // pred_check
      _
    $region19: #{tpu_custom_call.1} parent=1 // pred_check_branch
      %53 = sbr.rel (0) target = $region21
    $region20: #{tpu_custom_call.1} parent=1 // pred_region
      _
    $region21: #{tpu_custom_call.1} parent=1 // pred_fallthru
      _
    // Predicated region
    $region22: #{tpu_custom_call.1} parent=1 // pred_check
      _
    $region23: #{tpu_custom_call.1} parent=1 // pred_check_branch
      %55 = sbr.rel (0) target = $region25
    $region24: #{tpu_custom_call.1} parent=1 // pred_region
      %s57 = ssub.s32 1024, 1024
      %58 = vsyncadd [#allocation9], %s57
      %s59 = sshll.u32 [#allocation8], 4
      %s60 = int_to_ptr.vmem [resolvable:$true] %s59
      %65 = dma.hbm_to_vmem [thread:$0]  %s5, 1024, %s60, [#allocation9], 256, 256, 16
    $region25: #{tpu_custom_call.1} parent=1 // pred_fallthru
      _
    // Predicated region
    $region26: #{tpu_custom_call.1} parent=1 // pred_check
      _
    $region27: #{tpu_custom_call.1} parent=1 // pred_check_branch
      %67 = sbr.rel (0) target = $region29
    $region28: #{tpu_custom_call.1} parent=1 // pred_region
      _
    $region29: #{tpu_custom_call.1} parent=1 // pred_fallthru
      _
    // Predicated region
    $region30: #{tpu_custom_call.1} parent=1 // pred_check
      _
    $region31: #{tpu_custom_call.1} parent=1 // pred_check_branch
      %69 = sbr.rel (0) target = $region33
    $region32: #{tpu_custom_call.1} parent=1 // pred_region
      %s71 = ssub.s32 4096, 4096
      %72 = vsyncadd [#allocation9], %s71
      %s73 = sshll.u32 [#allocation10], 4
      %s74 = int_to_ptr.vmem [resolvable:$true] %s73
      %79 = dma.hbm_to_vmem [thread:$0]  %s7, 4096, %s74, [#allocation9], 128, 128, 8
    $region33: #{tpu_custom_call.1} parent=1 // pred_fallthru
      _
    // Predicated region
    $region34: #{tpu_custom_call.1} parent=1 // pred_check
      _
    $region35: #{tpu_custom_call.1} parent=1 // pred_check_branch
      %81 = sbr.rel (0) target = $region37
    $region36: #{tpu_custom_call.1} parent=1 // pred_region
      _
    $region37: #{tpu_custom_call.1} parent=1 // pred_fallthru
      _
    // Predicated region
    $region38: #{tpu_custom_call.1} parent=1 // pred_check
      _
    $region39: #{tpu_custom_call.1} parent=1 // pred_check_branch
      %83 = sbr.rel (0) target = $region41
    $region40: #{tpu_custom_call.1} parent=1 // pred_region
      %84 = dma.done [#allocation3], 32
    $region41: #{tpu_custom_call.1} parent=1 // pred_fallthru
      _
    // Predicated region
    $region42: #{tpu_custom_call.1} parent=1 // pred_check
      _
    $region43: #{tpu_custom_call.1} parent=1 // pred_check_branch
      %86 = sbr.rel (0) target = $region45
    $region44: #{tpu_custom_call.1} parent=1 // pred_region
      %87 = dma.done [#allocation6], 32
    $region45: #{tpu_custom_call.1} parent=1 // pred_fallthru
      _
    // Predicated region
    $region46: #{tpu_custom_call.1} parent=1 // pred_check
      _
    $region47: #{tpu_custom_call.1} parent=1 // pred_check_branch
      %89 = sbr.rel (0) target = $region49
    $region48: #{tpu_custom_call.1} parent=1 // pred_region
      %90 = dma.done [#allocation6], 512
    $region49: #{tpu_custom_call.1} parent=1 // pred_fallthru
      _
    // Predicated region
    $region50: #{tpu_custom_call.1} parent=1 // pred_check
      _
    $region51: #{tpu_custom_call.1} parent=1 // pred_check_branch
      %92 = sbr.rel (0) target = $region53
    $region52: #{tpu_custom_call.1} parent=1 // pred_region
      %93 = dma.done [#allocation9], 1024
    $region53: #{tpu_custom_call.1} parent=1 // pred_fallthru
      _
    // Predicated region
    $region54: #{tpu_custom_call.1} parent=1 // pred_check
      _
    $region55: #{tpu_custom_call.1} parent=1 // pred_check_branch
      %95 = sbr.rel (0) target = $region57
    $region56: #{tpu_custom_call.1} parent=1 // pred_region
      %96 = dma.done [#allocation9], 4096
    $region57: #{tpu_custom_call.1} parent=1 // pred_fallthru
      _
    %v97 = vld [vmem:[#allocation2] sm:$0x3]
    %vm98 = vcmask 254976
    %v99 = vsel %vm98, %v97, 0.0
    %v100 = vrot.slane %v99, 4
    %v101 = vadd.f32 %v99, %v100
    %v102 = vrot.slane %v101, 2
    %v103 = vadd.f32 %v101, %v102
    %v104 = vrot.slane %v103, 1
    %v105 = vadd.f32 %v103, %v104
    %v106 = vrcp.pop 2.0
    %v107 = vmul.f32 %v105, %v106
    %v108 = vsub.f32 %v97, %v107
    %v109 = vmul.f32 %v108, %v108
    %v110 = vsel %vm98, %v109, 0.0
    %v111 = vrot.slane %v110, 4
    %v112 = vadd.f32 %v110, %v111
    %v113 = vrot.slane %v112, 2
    %v114 = vadd.f32 %v112, %v113
    %v115 = vrot.slane %v114, 1
    %v116 = vadd.f32 %v114, %v115
    %v117 = vmul.f32 %v116, %v106
    %v118 = vadd.f32 %v117, 1e-05
    %v119 = vrsqrt.pop %v118
    %v120 = vmul.f32 %v108, %v119
    %v121 = vld [vmem:[#allocation5] sm:$0x3]
    %v122 = vmul.f32 %v120, %v121
    %v123 = vld [vmem:[%s2] sm:$0x3]
    %v124 = vadd.f32 %v122, %v123
    %v125 = vld [vmem:[#allocation7] sm:$0xff]
    %v126 = vld [vmem:[#allocation7 + $0x8] sm:$0xff]
    %v127 = vld [vmem:[#allocation7 + $0x10] sm:$0xff]
    %v128 = vld [vmem:[#allocation7 + $0x18] sm:$0xff]
    %v129 = vld [vmem:[%s4] sm:$0x1]
    %v131 = vlaneseq
    %v132 = vshrl.u32 %v131, 7
    %v133 = vsub.s32 0, %v132
    %v134 = vrot.slane %v129, %v133
    %vm136 = vcmask 261120
    %v138 = vsel %vm136, %v97, 0
    %140 = vmatprep.subr.mxu0 0.0
    %141 = vmatpush1.msra.mxu0 0.0
    %142 = vmatprep.subr.mxu0 0.0
    %143 = vmatpush1.msra.mxu0 0.0
    %144 = vmatprep.subr.mxu0 0.0
    %145 = vmatpush1.msra.mxu0 0.0
    %146 = vmatprep.subr.mxu0 0.0
    %147 = vmatpush1.msra.mxu0 0.0
    %148 = vmatprep.subr.mxu0 0.0
    %149 = vmatpush1.msra.mxu0 0.0
    %150 = vmatprep.subr.mxu0 0.0
    %151 = vmatpush1.msra.mxu0 0.0
    %152 = vmatprep.subr.mxu0 0.0
    %153 = vmatpush1.msra.mxu0 0.0
    %154 = vmatprep.subr.mxu0 0.0
    %155 = vmatpush1.msra.mxu0 0.0
    %156 = vmatprep.subr.mxu0 0.0
    %157 = vmatpush1.msra.mxu0 0.0
    %158 = vmatprep.subr.mxu0 0.0
    %159 = vmatpush1.msra.mxu0 0.0
    %160 = vmatprep.subr.mxu0 0.0
    %161 = vmatpush1.msra.mxu0 0.0
    %162 = vmatprep.subr.mxu0 0.0
    %163 = vmatpush1.msra.mxu0 0.0
    %164 = vmatprep.subr.mxu0 0.0
    %165 = vmatpush1.msra.mxu0 %v128
    %166 = vmatprep.subr.mxu0 0.0
    %167 = vmatpush1.msra.mxu0 %v127
    %168 = vmatprep.subr.mxu0 0.0
    %169 = vmatpush1.msra.mxu0 %v126
    %170 = vmatprep.subr.mxu0 0.0
    %171 = vmatpush1.msra.mxu0 %v125
    %172 = vmatprep.subr.mxu0 0.0
    %173 = vmatpush2.msra.mxu0 0.0
    %174 = vmatprep.subr.mxu0 0.0
    %175 = vmatpush2.msra.mxu0 0.0
    %176 = vmatprep.subr.mxu0 0.0
    %177 = vmatpush2.msra.mxu0 0.0
    %178 = vmatprep.subr.mxu0 0.0
    %179 = vmatpush2.msra.mxu0 0.0
    %180 = vmatprep.subr.mxu0 0.0
    %181 = vmatpush2.msra.mxu0 0.0
    %182 = vmatprep.subr.mxu0 0.0
    %183 = vmatpush2.msra.mxu0 0.0
    %184 = vmatprep.subr.mxu0 0.0
    %185 = vmatpush2.msra.mxu0 0.0
    %186 = vmatprep.subr.mxu0 0.0
    %187 = vmatpush2.msra.mxu0 0.0
    %188 = vmatprep.subr.mxu0 0.0
    %189 = vmatpush2.msra.mxu0 0.0
    %190 = vmatprep.subr.mxu0 0.0
    %191 = vmatpush2.msra.mxu0 0.0
    %192 = vmatprep.subr.mxu0 0.0
    %193 = vmatpush2.msra.mxu0 0.0
    %194 = vmatprep.subr.mxu0 0.0
    %195 = vmatpush2.msra.mxu0 0.0
    %196 = vmatprep.subr.mxu0 0.0
    %197 = vmatpush2.msra.mxu0 0.0
    %198 = vmatprep.subr.mxu0 0.0
    %199 = vmatpush2.msra.mxu0 0.0
    %200 = vmatprep.subr.mxu0 0.0
    %201 = vmatpush2.msra.mxu0 0.0
    %202 = vmatprep.subr.mxu0 0.0
    %203 = vmatpush2.msra.mxu0 0.0
    %204 = vmatprep.mubr.f32.mxu0 0.0
    %205 = vmatmul.mubr.f32.gmra.mxu0 %v138
    %v206 = vpop.f32.mrf.mxu0
    %v207 = vadd.f32 %v134, %v206
    %v208 = vpop.f32.mrf.mxu0
    %209 = vdwg.mxu0
    %v210 = vld [vmem:[#allocation8] sm:$0xff]
    %v211 = vld [vmem:[#allocation8 + $0x8] sm:$0xff]
    %v212 = vld [vmem:[#allocation8 + $0x10] sm:$0xff]
    %v213 = vld [vmem:[#allocation8 + $0x18] sm:$0xff]
    %v214 = vld [vmem:[#allocation8 + $0x20] sm:$0xff]
    %v215 = vld [vmem:[#allocation8 + $0x28] sm:$0xff]
    %v216 = vld [vmem:[#allocation8 + $0x30] sm:$0xff]
    %v217 = vld [vmem:[#allocation8 + $0x38] sm:$0xff]
    %v218 = vld [vmem:[%s6] sm:$0x3]
    %v220 = vlaneseq
    %v221 = vshrl.u32 %v220, 7
    %v222 = vsub.s32 0, %v221
    %v223 = vrot.slane %v218, %v222
    %v224 = vlaneseq
    %v225 = vshrl.u32 %v224, 7
    %v226 = vsub.s32 1, %v225
    %v227 = vrot.slane %v218, %v226
    %v231 = vsel %vm136, %v124, 0
    %233 = vmatprep.subr.mxu0 0.0
    %234 = vmatpush1.msra.mxu0 0.0
    %235 = vmatprep.subr.mxu0 0.0
    %236 = vmatpush1.msra.mxu0 0.0
    %237 = vmatprep.subr.mxu0 0.0
    %238 = vmatpush1.msra.mxu0 0.0
    %239 = vmatprep.subr.mxu0 0.0
    %240 = vmatpush1.msra.mxu0 0.0
    %241 = vmatprep.subr.mxu0 0.0
    %242 = vmatpush1.msra.mxu0 0.0
    %243 = vmatprep.subr.mxu0 0.0
    %244 = vmatpush1.msra.mxu0 0.0
    %245 = vmatprep.subr.mxu0 0.0
    %246 = vmatpush1.msra.mxu0 0.0
    %247 = vmatprep.subr.mxu0 0.0
    %248 = vmatpush1.msra.mxu0 0.0
    %249 = vmatprep.subr.mxu0 0.0
    %250 = vmatpush1.msra.mxu0 0.0
    %251 = vmatprep.subr.mxu0 0.0
    %252 = vmatpush1.msra.mxu0 0.0
    %253 = vmatprep.subr.mxu0 0.0
    %254 = vmatpush1.msra.mxu0 0.0
    %255 = vmatprep.subr.mxu0 0.0
    %256 = vmatpush1.msra.mxu0 0.0
    %257 = vmatprep.subr.mxu0 %v217
    %258 = vmatpush1.msra.mxu0 %v216
    %259 = vmatprep.subr.mxu0 %v215
    %260 = vmatpush1.msra.mxu0 %v214
    %261 = vmatprep.subr.mxu0 %v213
    %262 = vmatpush1.msra.mxu0 %v212
    %263 = vmatprep.subr.mxu0 %v211
    %264 = vmatpush1.msra.mxu0 %v210
    %265 = vmatprep.subr.mxu0 0.0
    %266 = vmatpush2.msra.mxu0 0.0
    %267 = vmatprep.subr.mxu0 0.0
    %268 = vmatpush2.msra.mxu0 0.0
    %269 = vmatprep.subr.mxu0 0.0
    %270 = vmatpush2.msra.mxu0 0.0
    %271 = vmatprep.subr.mxu0 0.0
    %272 = vmatpush2.msra.mxu0 0.0
    %273 = vmatprep.subr.mxu0 0.0
    %274 = vmatpush2.msra.mxu0 0.0
    %275 = vmatprep.subr.mxu0 0.0
    %276 = vmatpush2.msra.mxu0 0.0
    %277 = vmatprep.subr.mxu0 0.0
    %278 = vmatpush2.msra.mxu0 0.0
    %279 = vmatprep.subr.mxu0 0.0
    %280 = vmatpush2.msra.mxu0 0.0
    %281 = vmatprep.subr.mxu0 0.0
    %282 = vmatpush2.msra.mxu0 0.0
    %283 = vmatprep.subr.mxu0 0.0
    %284 = vmatpush2.msra.mxu0 0.0
    %285 = vmatprep.subr.mxu0 0.0
    %286 = vmatpush2.msra.mxu0 0.0
    %287 = vmatprep.subr.mxu0 0.0
    %288 = vmatpush2.msra.mxu0 0.0
    %289 = vmatprep.subr.mxu0 0.0
    %290 = vmatpush2.msra.mxu0 0.0
    %291 = vmatprep.subr.mxu0 0.0
    %292 = vmatpush2.msra.mxu0 0.0
    %293 = vmatprep.subr.mxu0 0.0
    %294 = vmatpush2.msra.mxu0 0.0
    %295 = vmatprep.subr.mxu0 0.0
    %296 = vmatpush2.msra.mxu0 0.0
    %297 = vmatprep.mubr.f32.mxu0 0.0
    %298 = vmatmul.mubr.f32.gmra.mxu0 %v231
    %v299 = vpop.f32.mrf.mxu0
    %v300 = vadd.f32 %v223, %v299
    %v301 = vpop.f32.mrf.mxu0
    %v302 = vadd.f32 %v227, %v301
    %303 = vdwg.mxu0
    %v304 = vmax.f32 %v300, 0.0
    %v305 = vmax.f32 %v302, 0.0
    %v306 = vld [vmem:[#allocation10] sm:$0xff]
    %v307 = vld [vmem:[#allocation10 + $0x8] sm:$0xff]
    %v308 = vld [vmem:[#allocation10 + $0x10] sm:$0xff]
    %v309 = vld [vmem:[#allocation10 + $0x18] sm:$0xff]
    %v310 = vld [vmem:[#allocation10 + $0x20] sm:$0xff]
    %v311 = vld [vmem:[#allocation10 + $0x28] sm:$0xff]
    %v312 = vld [vmem:[#allocation10 + $0x30] sm:$0xff]
    %v313 = vld [vmem:[#allocation10 + $0x38] sm:$0xff]
    %v314 = vld [vmem:[#allocation10 + $0x40] sm:$0xff]
    %v315 = vld [vmem:[#allocation10 + $0x48] sm:$0xff]
    %v316 = vld [vmem:[#allocation10 + $0x50] sm:$0xff]
    %v317 = vld [vmem:[#allocation10 + $0x58] sm:$0xff]
    %v318 = vld [vmem:[#allocation10 + $0x60] sm:$0xff]
    %v319 = vld [vmem:[#allocation10 + $0x68] sm:$0xff]
    %v320 = vld [vmem:[#allocation10 + $0x70] sm:$0xff]
    %v321 = vld [vmem:[#allocation10 + $0x78] sm:$0xff]
    %v322 = vld [vmem:[#allocation10 + $0x80] sm:$0xff]
    %v323 = vld [vmem:[#allocation10 + $0x88] sm:$0xff]
    %v324 = vld [vmem:[#allocation10 + $0x90] sm:$0xff]
    %v325 = vld [vmem:[#allocation10 + $0x98] sm:$0xff]
    %v326 = vld [vmem:[#allocation10 + $0xa0] sm:$0xff]
    %v327 = vld [vmem:[#allocation10 + $0xa8] sm:$0xff]
    %v328 = vld [vmem:[#allocation10 + $0xb0] sm:$0xff]
    %v329 = vld [vmem:[#allocation10 + $0xb8] sm:$0xff]
    %v330 = vld [vmem:[#allocation10 + $0xc0] sm:$0xff]
    %v331 = vld [vmem:[#allocation10 + $0xc8] sm:$0xff]
    %v332 = vld [vmem:[#allocation10 + $0xd0] sm:$0xff]
    %v333 = vld [vmem:[#allocation10 + $0xd8] sm:$0xff]
    %v334 = vld [vmem:[#allocation10 + $0xe0] sm:$0xff]
    %v335 = vld [vmem:[#allocation10 + $0xe8] sm:$0xff]
    %v336 = vld [vmem:[#allocation10 + $0xf0] sm:$0xff]
    %v337 = vld [vmem:[#allocation10 + $0xf8] sm:$0xff]
    %v338 = vld [vmem:[%s8] sm:$0x1]
    %v340 = vlaneseq
    %v341 = vshrl.u32 %v340, 7
    %v342 = vsub.s32 0, %v341
    %v343 = vrot.slane %v338, %v342
    %345 = vmatprep.subr.mxu0 0.0
    %346 = vmatpush1.msra.mxu0 %v321
    %347 = vmatprep.subr.mxu0 0.0
    %348 = vmatpush1.msra.mxu0 %v320
    %349 = vmatprep.subr.mxu0 0.0
    %350 = vmatpush1.msra.mxu0 %v319
    %351 = vmatprep.subr.mxu0 0.0
    %352 = vmatpush1.msra.mxu0 %v318
    %353 = vmatprep.subr.mxu0 0.0
    %354 = vmatpush1.msra.mxu0 %v317
    %355 = vmatprep.subr.mxu0 0.0
    %356 = vmatpush1.msra.mxu0 %v316
    %357 = vmatprep.subr.mxu0 0.0
    %358 = vmatpush1.msra.mxu0 %v315
    %359 = vmatprep.subr.mxu0 0.0
    %360 = vmatpush1.msra.mxu0 %v314
    %361 = vmatprep.subr.mxu0 0.0
    %362 = vmatpush1.msra.mxu0 %v313
    %363 = vmatprep.subr.mxu0 0.0
    %364 = vmatpush1.msra.mxu0 %v312
    %365 = vmatprep.subr.mxu0 0.0
    %366 = vmatpush1.msra.mxu0 %v311
    %367 = vmatprep.subr.mxu0 0.0
    %368 = vmatpush1.msra.mxu0 %v310
    %369 = vmatprep.subr.mxu0 0.0
    %370 = vmatpush1.msra.mxu0 %v309
    %371 = vmatprep.subr.mxu0 0.0
    %372 = vmatpush1.msra.mxu0 %v308
    %373 = vmatprep.subr.mxu0 0.0
    %374 = vmatpush1.msra.mxu0 %v307
    %375 = vmatprep.subr.mxu0 0.0
    %376 = vmatpush1.msra.mxu0 %v306
    %377 = vmatprep.subr.mxu0 0.0
    %378 = vmatpush2.msra.mxu0 %v337
    %379 = vmatprep.subr.mxu0 0.0
    %380 = vmatpush2.msra.mxu0 %v336
    %381 = vmatprep.subr.mxu0 0.0
    %382 = vmatpush2.msra.mxu0 %v335
    %383 = vmatprep.subr.mxu0 0.0
    %384 = vmatpush2.msra.mxu0 %v334
    %385 = vmatprep.subr.mxu0 0.0
    %386 = vmatpush2.msra.mxu0 %v333
    %387 = vmatprep.subr.mxu0 0.0
    %388 = vmatpush2.msra.mxu0 %v332
    %389 = vmatprep.subr.mxu0 0.0
    %390 = vmatpush2.msra.mxu0 %v331
    %391 = vmatprep.subr.mxu0 0.0
    %392 = vmatpush2.msra.mxu0 %v330
    %393 = vmatprep.subr.mxu0 0.0
    %394 = vmatpush2.msra.mxu0 %v329
    %395 = vmatprep.subr.mxu0 0.0
    %396 = vmatpush2.msra.mxu0 %v328
    %397 = vmatprep.subr.mxu0 0.0
    %398 = vmatpush2.msra.mxu0 %v327
    %399 = vmatprep.subr.mxu0 0.0
    %400 = vmatpush2.msra.mxu0 %v326
    %401 = vmatprep.subr.mxu0 0.0
    %402 = vmatpush2.msra.mxu0 %v325
    %403 = vmatprep.subr.mxu0 0.0
    %404 = vmatpush2.msra.mxu0 %v324
    %405 = vmatprep.subr.mxu0 0.0
    %406 = vmatpush2.msra.mxu0 %v323
    %407 = vmatprep.subr.mxu0 0.0
    %408 = vmatpush2.msra.mxu0 %v322
    %409 = vmatprep.mubr.f32.mxu0 %v305
    %410 = vmatmul.mubr.f32.gmra.mxu0 %v304
    %v411 = vpop.f32.mrf.mxu0
    %v412 = vadd.f32 %v343, %v411
    %v413 = vpop.f32.mrf.mxu0
    %414 = vdwg.mxu0
    %v415 = vadd.f32 %v207, %v412
    %416 = vst [vmem:[#allocation11] sm:$0x3] %v415
    // Predicated region
    $region58: #{tpu_custom_call.1} parent=1 // pred_check
      _
    $region59: #{tpu_custom_call.1} parent=1 // pred_check_branch
      %418 = sbr.rel (0) target = $region61
    $region60: #{tpu_custom_call.1} parent=1 // pred_region
      %s420 = ssub.s32 32, 32
      %421 = vsyncadd [#allocation4], %s420
      %s423 = sshll.u32 [#allocation11], 4
      %s424 = int_to_ptr.vmem [resolvable:$true] %s423
      %426 = dma.vmem_to_hbm [thread:$0]  %s424, 32, %s9, [#allocation4]
    $region61: #{tpu_custom_call.1} parent=1 // pred_fallthru
      _
    // Predicated region
    $region62: #{tpu_custom_call.1} parent=1 // pred_check
      _
    $region63: #{tpu_custom_call.1} parent=1 // pred_check_branch
      %428 = sbr.rel (0) target = $region65
    $region64: #{tpu_custom_call.1} parent=1 // pred_region
      %429 = dma.done [#allocation4], 32
    $region65: #{tpu_custom_call.1} parent=1 // pred_fallthru
      _
    %430 = vsyncpa [#allocation3], 1
    %431 = vsyncpa [#allocation6], 1
    %432 = vsyncpa [#allocation9], 1
    %433 = vsyncpa [#allocation4], 1

</llo_original>
